<compile_context>
chip_gen: v7x
topology: tpu7x:2x2x1
jax: 0.10.0
libtpu: 0.0.40
codegen_flags: <defaults>
</compile_context>

<pallas_src>
import jax
import jax.numpy as jnp
from jax import lax
from jax.experimental import pallas as pl
from jax.experimental.pallas import tpu as pltpu

_COS_EPS = 1e-8  # torch.nn.CosineSimilarity default eps


def _nt_xent_kernel(q_ref, k_ref, out_ref, m_scr, l_scr, pos_scr):
    """One (row-block i, col-block k) step of the online-logsumexp NT-Xent."""
    i = pl.program_id(0)
    k_idx = pl.program_id(1)
    num_k = pl.num_programs(1)
    half = num_k // 2  # static: column-block offset of the positive partner

    @pl.when(k_idx == 0)
    def _init():
        m_scr[...] = jnp.full(m_scr.shape, -jnp.inf, dtype=m_scr.dtype)
        l_scr[...] = jnp.zeros(l_scr.shape, dtype=l_scr.dtype)
        pos_scr[...] = jnp.zeros(pos_scr.shape, dtype=pos_scr.dtype)

    q = q_ref[...]   # (TQ, D), rows already scaled by inv_norm / sqrt(T)
    kk = k_ref[...]  # (TK, D)

    # Similarity tile on the MXU: contract the last dim of both operands
    # (no transpose / relayout), accumulate in f32.
    s = lax.dot_general(q, kk, dimension_numbers=(((1,), (1,)), ((), ())),
                        preferred_element_type=jnp.float32)          # (TQ, TK)

    tq, tk = s.shape
    local_r = lax.broadcasted_iota(jnp.int32, (tq, tk), 0)
    local_c = lax.broadcasted_iota(jnp.int32, (tq, tk), 1)
    is_diag = local_r == local_c

    # Positive logit: row a's partner is (a + B) mod 2B, which is exactly the
    # diagonal of the tile whose column block is (i +/- half).  Extract it from
    # the tile already in registers; no extra operand / DMA needed.
    partner = jnp.where(i < half, i + half, i - half)

    @pl.when(k_idx == partner)
    def _pos():
        pos_scr[...] = jnp.sum(jnp.where(is_diag, s, 0.0),
                               axis=-1, keepdims=True)               # (TQ, 1)

    # Exclude self-similarity; the global diagonal only lives in i == k tiles.
    # exp(-inf) == 0, so no second select is needed downstream.
    s = jnp.where(jnp.logical_and(i == k_idx, is_diag), -jnp.inf, s)

    # Online logsumexp update over the column blocks.
    m_prev = m_scr[...]
    m_new = jnp.maximum(m_prev, jnp.max(s, axis=-1, keepdims=True))   # (TQ, 1)
    l_scr[...] = (jnp.exp(m_prev - m_new) * l_scr[...]
                  + jnp.sum(jnp.exp(s - m_new), axis=-1, keepdims=True))
    m_scr[...] = m_new

    @pl.when(k_idx == num_k - 1)
    def _finalize():
        out_ref[...] = m_scr[...] + jnp.log(l_scr[...]) - pos_scr[...]


def _pick_block(batch_size, requested=None):
    if requested is not None:
        if batch_size % requested or requested % 8:
            raise ValueError("block_size must divide batch_size and be a multiple of 8")
        return requested
    for t in (512, 256, 128, 64, 32, 16, 8):
        if batch_size % t == 0:
            return t
    # TODO(synk): pad + mask rows for batch sizes that are not a multiple of 8.
    raise ValueError("batch_size must be a multiple of 8")


def nt_xent_loss(z_i, z_j, *, temperature, world_size=1,
                 matmul_dtype=jnp.bfloat16, block_size=None):
    """Pallas NT-Xent forward.  z_i, z_j: (B, D).  Returns scalar f32 loss."""
    assert world_size == 1, "multi-host all_gather not modeled"
    # TODO(synk): GatherLayer (dist.all_gather) has no single-chip equivalent;
    # world_size=1 makes it an identity, which is what we implement.
    batch_size, feat = z_i.shape
    two_b = 2 * batch_size

    tile = _pick_block(batch_size, block_size)
    num_blocks = two_b // tile          # grid extent along both axes

    # Fold cosine normalization and 1/temperature into the matmul operands:
    #   zs[a] = z[a] / max(||z[a]||, sqrt(eps)) / sqrt(T)
    # so dot(zs[a], zs[b]) == cos_sim(z[a], z[b]) / T.  (torch clamps the
    # *product* ||a||*||b|| at eps; the per-row clamp only differs for
    # pathological near-zero-norm rows.)
    z = jnp.concatenate([z_i, z_j], axis=0).astype(jnp.float32)       # (2B, D)
    inv_norm = 1.0 / jnp.maximum(
        jnp.sqrt(jnp.sum(z * z, axis=-1, keepdims=True)), _COS_EPS ** 0.5)
    zs = (z * inv_norm * (float(temperature) ** -0.5)).astype(matmul_dtype)

    per_row = pl.pallas_call(
        _nt_xent_kernel,
        out_shape=jax.ShapeDtypeStruct((two_b, 1), jnp.float32),
        grid_spec=pltpu.PrefetchScalarGridSpec(
            num_scalar_prefetch=0,
            grid=(num_blocks, num_blocks),
            in_specs=[
                pl.BlockSpec((tile, feat), lambda i, k: (i, 0)),  # LHS rows
                pl.BlockSpec((tile, feat), lambda i, k: (k, 0)),  # RHS rows
            ],
            out_specs=pl.BlockSpec((tile, 1), lambda i, k: (i, 0)),
            scratch_shapes=[pltpu.VMEM((tile, 1), jnp.float32),   # running max
                            pltpu.VMEM((tile, 1), jnp.float32),   # running sum
                            pltpu.VMEM((tile, 1), jnp.float32)],  # positive logit
        ),
        compiler_params=pltpu.CompilerParams(
            dimension_semantics=("parallel", "arbitrary")),
    )(zs, zs)

    return jnp.sum(per_row) / jnp.float32(two_b)


def _nt_xent_reference(z_i, z_j, *, temperature):
    """Plain-JAX reference mirroring the PyTorch module (world_size=1)."""
    b = z_i.shape[0]
    z = jnp.concatenate([z_i, z_j], axis=0).astype(jnp.float32)
    dots = z @ z.T
    norms = jnp.sqrt(jnp.sum(z * z, axis=-1, keepdims=True))
    sim = dots / jnp.maximum(norms * norms.T, _COS_EPS) / temperature
    two_b = 2 * b
    idx = jnp.arange(two_b)
    pos_col = jnp.where(idx < b, idx + b, idx - b)
    pos = sim[idx, pos_col]
    sim_no_diag = jnp.where(jnp.eye(two_b, dtype=bool), -jnp.inf, sim)
    lse = jax.scipy.special.logsumexp(sim_no_diag, axis=-1)
    return jnp.sum(lse - pos) / two_b


if __name__ == "__main__":
    batch_size = 8       # per-"device" batch
    hidden = 32          # projection dim
    temperature = 0.5

    key = jax.random.PRNGKey(0)
    k1, k2 = jax.random.split(key)
    z_i = jax.random.normal(k1, (batch_size, hidden), dtype=jnp.float32)
    z_j = jax.random.normal(k2, (batch_size, hidden), dtype=jnp.float32)

    ref = _nt_xent_reference(z_i, z_j, temperature=temperature)

    # Default bf16 MXU path (native MXU input dtype on v5e/v6e/v7x).
    loss_bf16 = nt_xent_loss(z_i, z_j, temperature=temperature, world_size=1)
    loss_bf16 = jax.block_until_ready(loss_bf16)
    assert jnp.allclose(loss_bf16, ref, rtol=5e-2, atol=5e-2), (loss_bf16, ref)

    # f32 validation path (tight parity with the torch-equivalent reference).
    loss_f32 = nt_xent_loss(z_i, z_j, temperature=temperature, world_size=1,
                            matmul_dtype=jnp.float32)
    loss_f32 = jax.block_until_ready(loss_f32)
    assert jnp.allclose(loss_f32, ref, rtol=1e-4, atol=1e-4), (loss_f32, ref)

    print("KERNEL_OK")
</pallas_src>

<mosaic_0001>
module attributes {stable_mosaic.version = 11 : i64} {
  func.func @_nt_xent_kernel(%arg0: i32, %arg1: i32, %arg2: memref<8x32xbf16, #tpu.memory_space<vmem>>, %arg3: memref<8x32xbf16, #tpu.memory_space<vmem>>, %arg4: memref<8x1xf32, #tpu.memory_space<vmem>>, %arg5: memref<8x1xf32, #tpu.memory_space<vmem>>, %arg6: memref<8x1xf32, #tpu.memory_space<vmem>>, %arg7: memref<8x1xf32, #tpu.memory_space<vmem>>) attributes {dimension_semantics = [#tpu.dimension_semantics<parallel>, #tpu.dimension_semantics<arbitrary>], iteration_bounds = array<i64: 2, 2>, scalar_prefetch = 0 : i64, scratch_operands = 3 : i64, tpu.core_type = #tpu.core_type<tc>, window_params = [{transform_indices = @transform_0, window_bounds = array<i64: 8, 32>}, {transform_indices = @transform_1, window_bounds = array<i64: 8, 32>}, {transform_indices = @transform_2, window_bounds = array<i64: 8, 1>}]} {
    %c0_i32 = arith.constant 0 : i32
    %0 = arith.cmpi eq, %arg1, %c0_i32 : i32
    %1 = arith.extui %0 : i1 to i32
    %c0_i32_0 = arith.constant 0 : i32
    %2 = arith.cmpi ne, %1, %c0_i32_0 : i32
    scf.if %2 {
      %cst_20 = arith.constant 0xFF800000 : f32
      %40 = vector.broadcast %cst_20 : f32 to vector<8x1xf32>
      %c0_21 = arith.constant 0 : index
      %c0_22 = arith.constant 0 : index
      %41 = vector.load %arg5[%c0_21, %c0_22] : memref<8x1xf32, #tpu.memory_space<vmem>>, vector<8x1xf32>
      tpu.vector_store %arg5[%c0_21, %c0_22], %40 {strides = array<i32>} : memref<8x1xf32, #tpu.memory_space<vmem>>, vector<8x1xf32>,
      %cst_23 = arith.constant 0.000000e+00 : f32
      %42 = vector.broadcast %cst_23 : f32 to vector<8x1xf32>
      %c0_24 = arith.constant 0 : index
      %c0_25 = arith.constant 0 : index
      %43 = vector.load %arg6[%c0_24, %c0_25] : memref<8x1xf32, #tpu.memory_space<vmem>>, vector<8x1xf32>
      tpu.vector_store %arg6[%c0_24, %c0_25], %42 {strides = array<i32>} : memref<8x1xf32, #tpu.memory_space<vmem>>, vector<8x1xf32>,
      %cst_26 = arith.constant 0.000000e+00 : f32
      %44 = vector.broadcast %cst_26 : f32 to vector<8x1xf32>
      %c0_27 = arith.constant 0 : index
      %c0_28 = arith.constant 0 : index
      %45 = vector.load %arg7[%c0_27, %c0_28] : memref<8x1xf32, #tpu.memory_space<vmem>>, vector<8x1xf32>
      tpu.vector_store %arg7[%c0_27, %c0_28], %44 {strides = array<i32>} : memref<8x1xf32, #tpu.memory_space<vmem>>, vector<8x1xf32>,
    } else {
    }
    %c0 = arith.constant 0 : index
    %c0_1 = arith.constant 0 : index
    %3 = vector.load %arg2[%c0, %c0_1] : memref<8x32xbf16, #tpu.memory_space<vmem>>, vector<8x32xbf16>
    %c0_2 = arith.constant 0 : index
    %c0_3 = arith.constant 0 : index
    %4 = vector.load %arg3[%c0_2, %c0_3] : memref<8x32xbf16, #tpu.memory_space<vmem>>, vector<8x32xbf16>
    %cst = arith.constant dense<0.000000e+00> : vector<8x8xf32>
    %5 = tpu.matmul %3, %4, %cst {dimension_numbers = #tpu.dot_dimension_numbers<[1], [1], [0], [0], [0, 0, 1, 0], [], []>} : vector<8x32xbf16>, vector<8x32xbf16>, vector<8x8xf32> -> vector<8x8xf32>
    %6 = tpu.iota {dimensions = array<i32: 0>} : vector<8x8xi32>
    %7 = tpu.iota {dimensions = array<i32: 1>} : vector<8x8xi32>
    %8 = arith.cmpi eq, %6, %7 : vector<8x8xi32>
    %c1_i32 = arith.constant 1 : i32
    %9 = arith.cmpi slt, %arg0, %c1_i32 : i32
    %c1_i32_4 = arith.constant 1 : i32
    %10 = arith.addi %arg0, %c1_i32_4 : i32
    %c1_i32_5 = arith.constant 1 : i32
    %11 = arith.subi %arg0, %c1_i32_5 : i32
    %12 = arith.select %9, %10, %11 : i32
    %13 = arith.cmpi eq, %arg1, %12 : i32
    %14 = arith.extui %13 : i1 to i32
    %c0_i32_6 = arith.constant 0 : i32
    %15 = arith.cmpi ne, %14, %c0_i32_6 : i32
    scf.if %15 {
      %cst_20 = arith.constant 0.000000e+00 : f32
      %40 = vector.broadcast %cst_20 : f32 to vector<8x8xf32>
      %41 = arith.select %8, %5, %40 : vector<8x8xi1>, vector<8x8xf32>
      %cst_21 = arith.constant dense<0.000000e+00> : vector<8xf32>
      %42 = vector.multi_reduction <add>, %41, %cst_21 [1] : vector<8x8xf32> to vector<8xf32>
      %43 = vector.shape_cast %42 : vector<8xf32> to vector<8x1xf32>
      %c0_22 = arith.constant 0 : index
      %c0_23 = arith.constant 0 : index
      %44 = vector.load %arg7[%c0_22, %c0_23] : memref<8x1xf32, #tpu.memory_space<vmem>>, vector<8x1xf32>
      tpu.vector_store %arg7[%c0_22, %c0_23], %43 {strides = array<i32>} : memref<8x1xf32, #tpu.memory_space<vmem>>, vector<8x1xf32>,
    } else {
    }
    %16 = arith.cmpi eq, %arg0, %arg1 : i32
    %17 = vector.broadcast %16 : i1 to vector<8x8xi1>
    %18 = arith.andi %17, %8 : vector<8x8xi1>
    %cst_7 = arith.constant 0xFF800000 : f32
    %19 = vector.broadcast %cst_7 : f32 to vector<8x8xf32>
    %20 = arith.select %18, %19, %5 : vector<8x8xi1>, vector<8x8xf32>
    %c0_8 = arith.constant 0 : index
    %c0_9 = arith.constant 0 : index
    %21 = vector.load %arg5[%c0_8, %c0_9] : memref<8x1xf32, #tpu.memory_space<vmem>>, vector<8x1xf32>
    %cst_10 = arith.constant dense<0xFF800000> : vector<8xf32>
    %22 = vector.multi_reduction <maximumf>, %20, %cst_10 [1] : vector<8x8xf32> to vector<8xf32>
    %23 = vector.shape_cast %22 : vector<8xf32> to vector<8x1xf32>
    %24 = arith.maximumf %21, %23 : vector<8x1xf32>
    %25 = arith.subf %21, %24 : vector<8x1xf32>
    %26 = math.exp %25 : vector<8x1xf32>
    %c0_11 = arith.constant 0 : index
    %c0_12 = arith.constant 0 : index
    %27 = vector.load %arg6[%c0_11, %c0_12] : memref<8x1xf32, #tpu.memory_space<vmem>>, vector<8x1xf32>
    %28 = arith.mulf %26, %27 : vector<8x1xf32>
    %29 = vector.broadcast %24 : vector<8x1xf32> to vector<8x8xf32>
    %30 = arith.subf %20, %29 : vector<8x8xf32>
    %31 = math.exp %30 : vector<8x8xf32>
    %cst_13 = arith.constant dense<0.000000e+00> : vector<8xf32>
    %32 = vector.multi_reduction <add>, %31, %cst_13 [1] : vector<8x8xf32> to vector<8xf32>
    %33 = vector.shape_cast %32 : vector<8xf32> to vector<8x1xf32>
    %34 = arith.addf %28, %33 : vector<8x1xf32>
    %c0_14 = arith.constant 0 : index
    %c0_15 = arith.constant 0 : index
    %35 = vector.load %arg6[%c0_14, %c0_15] : memref<8x1xf32, #tpu.memory_space<vmem>>, vector<8x1xf32>
    tpu.vector_store %arg6[%c0_14, %c0_15], %34 {strides = array<i32>} : memref<8x1xf32, #tpu.memory_space<vmem>>, vector<8x1xf32>,
    %c0_16 = arith.constant 0 : index
    %c0_17 = arith.constant 0 : index
    %36 = vector.load %arg5[%c0_16, %c0_17] : memref<8x1xf32, #tpu.memory_space<vmem>>, vector<8x1xf32>
    tpu.vector_store %arg5[%c0_16, %c0_17], %24 {strides = array<i32>} : memref<8x1xf32, #tpu.memory_space<vmem>>, vector<8x1xf32>,
    %c1_i32_18 = arith.constant 1 : i32
    %37 = arith.cmpi eq, %arg1, %c1_i32_18 : i32
    %38 = arith.extui %37 : i1 to i32
    %c0_i32_19 = arith.constant 0 : i32
    %39 = arith.cmpi ne, %38, %c0_i32_19 : i32
    scf.if %39 {
      %c0_20 = arith.constant 0 : index
      %c0_21 = arith.constant 0 : index
      %40 = vector.load %arg5[%c0_20, %c0_21] : memref<8x1xf32, #tpu.memory_space<vmem>>, vector<8x1xf32>
      %c0_22 = arith.constant 0 : index
      %c0_23 = arith.constant 0 : index
      %41 = vector.load %arg6[%c0_22, %c0_23] : memref<8x1xf32, #tpu.memory_space<vmem>>, vector<8x1xf32>
      %42 = math.log %41 : vector<8x1xf32>
      %43 = arith.addf %40, %42 : vector<8x1xf32>
      %c0_24 = arith.constant 0 : index
      %c0_25 = arith.constant 0 : index
      %44 = vector.load %arg7[%c0_24, %c0_25] : memref<8x1xf32, #tpu.memory_space<vmem>>, vector<8x1xf32>
      %45 = arith.subf %43, %44 : vector<8x1xf32>
      %c0_26 = arith.constant 0 : index
      %c0_27 = arith.constant 0 : index
      %46 = vector.load %arg4[%c0_26, %c0_27] : memref<8x1xf32, #tpu.memory_space<vmem>>, vector<8x1xf32>
      tpu.vector_store %arg4[%c0_26, %c0_27], %45 {strides = array<i32>} : memref<8x1xf32, #tpu.memory_space<vmem>>, vector<8x1xf32>,
    } else {
    }
    return
  }
  func.func @transform_0(%arg0: i32, %arg1: i32) -> (i32, i32) {
    %c0_i32 = arith.constant 0 : i32
    %c0_i32_0 = arith.constant 0 : i32
    return %arg0, %c0_i32 : i32, i32
  }
  func.func @transform_1(%arg0: i32, %arg1: i32) -> (i32, i32) {
    %c0_i32 = arith.constant 0 : i32
    %c0_i32_0 = arith.constant 0 : i32
    return %arg1, %c0_i32 : i32, i32
  }
  func.func @transform_2(%arg0: i32, %arg1: i32) -> (i32, i32) {
    %c0_i32 = arith.constant 0 : i32
    %c0_i32_0 = arith.constant 0 : i32
    return %arg0, %c0_i32 : i32, i32
  }
}

</mosaic_0001>

<llo_original>
// kernel: tpu_custom_call.1
$region0: #{tpu_custom_call.1}
  #allocation0 [shape = 'u32[]', space=smem, size = 0x4, offset = 0x4, fixed_abs, tag = 'smem constant byte address 0x4 - core index']
  #allocation1 [shape = 'u32[144,128]{1,0:T(1,128)}', space=vmem, size = 0x12000, scoped, tag = 'internal scratch']
  #allocation2 [shape = 'f32[8,1]{1,0:T(8,128)}', space=vmem, size = 0x1000, scoped, tag = 'scratch operand']
  #allocation3 [shape = 'f32[8,1]{1,0:T(8,128)}', space=vmem, size = 0x1000, scoped, tag = 'scratch operand']
  #allocation4 [shape = 'f32[8,1]{1,0:T(8,128)}', space=vmem, size = 0x1000, scoped, tag = 'scratch operand']
  %s0 = inlined_call_operand.hbm [shape: bf16[16,32], index: 0, kind: input, shape index: {}]
  %s1 = inlined_call_operand.hbm [shape: bf16[16,32], index: 1, kind: input, shape index: {}]
  %s2 = inlined_call_operand.vmem [shape: f32[16,1], index: 2, kind: output, shape index: {}]
  %s3 = sld [smem:[#allocation0]]
  $region61: #{tpu_custom_call.1} parent=0
    _
  %s5 = ssub.s32 1, %s3
  %s6 = scalar_select 0, %s5, %s3
  $region1: #{tpu_custom_call.1} parent=0
    #allocation5 [shape = 'u8[4096]{0}', space=vmem, size = 0x1000, scoped, tag = 'input window, operand 0']
    #allocation6 [shape = 's32[2]{0}', space=sflag, size = 0x8, scoped, tag = 'scoped memory for tpu_custom_call.1']
    #allocation7 [shape = 'u8[4096]{0}', space=vmem, size = 0x1000, scoped, tag = 'input window, operand 1']
    #allocation8 [shape = 's32[2]{0}', space=sflag, size = 0x8, scoped, tag = 'scoped memory for tpu_custom_call.1']
    %7 = vsyncpa [#allocation6], 0
    %s8 = scalar_lea.sflag [#allocation6], 1
    %9 = vsyncpa %s8, 0
    %10 = vsyncpa [#allocation8], 0
    %s11 = scalar_lea.sflag [#allocation8], 1
    %12 = vsyncpa %s11, 0
    loop: start=0, step=1, limit=6
    $region2: #{tpu_custom_call.1} parent=1 // loop_pre_header
      _
    $region3: #{tpu_custom_call.1} parent=1 // loop_header
      %s14 = sphi 0, %s18
      %p15 = scmp.ge.s32.totalorder %s14, 6
      %s21 = sphi 0, %s33
      %s22 = sphi 0, %s29
      %s23 = sphi 0, %s21
      %s24 = sphi 0, %s22
      %s25 = sphi 0, %s23
      %s26 = sphi 0, %s24
      %s36 = sphi 0, %s38
      %s39 = sphi 0, %s36
      %s40 = sphi 0, %s39
      %s56 = sphi 0, %s40
      %s62 = sphi 0, %s64
      %s65 = sphi 0, %s62
      %s66 = sphi 0, %s65
      %s82 = sphi 0, %s66
      %s88 = sphi 0, %s90
      %s91 = sphi 0, %s88
      %s92 = sphi 0, %s91
      %s108 = sphi 0, %s92
    $region4: #{tpu_custom_call.1} parent=1 // loop_header_branch
      %17 = sbr.rel (%p15) target = $region8
    $region5: #{tpu_custom_call.1} parent=1 // loop_body
      %s19 = ssub.s32 %s14, 1
      %s20 = ssub.s32 %s14, 2
      %s27 = sadd.s32 1, %s22
      %p28 = scmp.ge.s32.totalorder %s27, 2
      %s29 = scalar_select %p28, 0, %s27
      %s30 = sadd.s32 1, %s21
      %s31 = scalar_select %p28, %s30, %s21
      %p32 = scmp.ge.s32.totalorder %s31, 2
      %s33 = scalar_select %p32, 0, %s31
      %s34 = ssub.s32 %s21, %s33
      %p35 = scmp.eq.s32.totalorder %s34, 0
      %s37 = sadd.s32 %s36, 1
      %s38 = scalar_select %p35, %s36, %s37
      %p41 = pneg %p35
      %p42 = scmp.eq.s32.totalorder %s14, 3
      %p43 = por %p41, %p42
      %p44 = scmp.ne.s32.totalorder %s36, %s39
      %p45 = scmp.eq.s32.totalorder %s14, 0
      %p46 = por %p44, %p45
      %p47 = scmp.ne.s32.totalorder %s36, %s39
      %p48 = scmp.eq.s32.totalorder %s19, 3
      %p49 = por %p47, %p48
      %p50 = scmp.ne.s32.totalorder %s39, %s40
      %p51 = scmp.eq.s32.totalorder %s19, 0
      %p52 = por %p50, %p51
      %p53 = scmp.ne.s32.totalorder %s39, %s40
      %p54 = scmp.eq.s32.totalorder %s20, 3
      %p55 = por %p53, %p54
      %p57 = scmp.ne.s32.totalorder %s40, %s56
      %p58 = scmp.eq.s32.totalorder %s20, 0
      %p59 = por %p57, %p58
      %s60 = ssub.s32 %s22, %s29
      %p61 = scmp.eq.s32.totalorder %s60, 0
      %s63 = sadd.s32 %s62, 1
      %s64 = scalar_select %p61, %s62, %s63
      %p67 = pneg %p61
      %p68 = scmp.eq.s32.totalorder %s14, 3
      %p69 = por %p67, %p68
      %p70 = scmp.ne.s32.totalorder %s62, %s65
      %p71 = scmp.eq.s32.totalorder %s14, 0
      %p72 = por %p70, %p71
      %p73 = scmp.ne.s32.totalorder %s62, %s65
      %p74 = scmp.eq.s32.totalorder %s19, 3
      %p75 = por %p73, %p74
      %p76 = scmp.ne.s32.totalorder %s65, %s66
      %p77 = scmp.eq.s32.totalorder %s19, 0
      %p78 = por %p76, %p77
      %p79 = scmp.ne.s32.totalorder %s65, %s66
      %p80 = scmp.eq.s32.totalorder %s20, 3
      %p81 = por %p79, %p80
      %p83 = scmp.ne.s32.totalorder %s66, %s82
      %p84 = scmp.eq.s32.totalorder %s20, 0
      %p85 = por %p83, %p84
      %s86 = ssub.s32 %s21, %s33
      %p87 = scmp.eq.s32.totalorder %s86, 0
      %s89 = sadd.s32 %s88, 1
      %s90 = scalar_select %p87, %s88, %s89
      %p93 = pneg %p87
      %p94 = scmp.eq.s32.totalorder %s14, 3
      %p95 = por %p93, %p94
      %p96 = scmp.ne.s32.totalorder %s88, %s91
      %p97 = scmp.eq.s32.totalorder %s14, 0
      %p98 = por %p96, %p97
      %p99 = scmp.ne.s32.totalorder %s88, %s91
      %p100 = scmp.eq.s32.totalorder %s19, 3
      %p101 = por %p99, %p100
      %p102 = scmp.ne.s32.totalorder %s91, %s92
      %p103 = scmp.eq.s32.totalorder %s19, 0
      %p104 = por %p102, %p103
      %p105 = scmp.ne.s32.totalorder %s91, %s92
      %p106 = scmp.eq.s32.totalorder %s20, 3
      %p107 = por %p105, %p106
      %p109 = scmp.ne.s32.totalorder %s92, %s108
      %p110 = scmp.eq.s32.totalorder %s20, 0
      %p111 = por %p109, %p110
      %p112 = scmp.le.s32.totalorder 1, %s14
      %p113 = scmp.lt.s32.totalorder %s14, 5
      %p114 = pnand %p112, %p113
      %p115 = pneg %p114
      // Predicated region
      $region9: #{tpu_custom_call.1} parent=5 // pred_check
        _
      $region10: #{tpu_custom_call.1} parent=5 // pred_check_branch
        %117 = sbr.rel (%p114) target = $region12
      $region11: #{tpu_custom_call.1} parent=5 // pred_region
        %s118 = ssub.s32 %s14, 1
      $region12: #{tpu_custom_call.1} parent=5 // pred_fallthru
        _
      %p119 = scmp.lt.s32.totalorder %s14, 4
      // Predicated region
      $region13: #{tpu_custom_call.1} parent=5 // pred_check
        %p120 = pneg %p119
      $region14: #{tpu_custom_call.1} parent=5 // pred_check_branch
        %122 = sbr.rel (%p120) target = $region16
      $region15: #{tpu_custom_call.1} parent=5 // pred_region
        // Predicated region
        $region17: #{tpu_custom_call.1} parent=15 // pred_check
          %p123 = pneg %p46
        $region18: #{tpu_custom_call.1} parent=15 // pred_check_branch
          %125 = sbr.rel (%p123) target = $region20
        $region19: #{tpu_custom_call.1} parent=15 // pred_region
          %s126 = sand.u32 %s36, 1
          %s127 = scalar_lea.sflag [#allocation6], %s126
          %s128 = sand.u32 %s36, 1
          %s129 = smul.addr %s128, 4
          %s130 = scalar_lea.vmem [#allocation5], %s129
          %s132 = ssub.s32 64, 64
          %133 = vsyncadd %s127, %s132
          %s134 = smul.addr %s21, 64
          %s135 = scalar_lea.hbm %s0, %s134
          %s137 = sshll.u32 %s130, 4
          %s138 = int_to_ptr.vmem [resolvable:$true] %s137
          %140 = dma.hbm_to_vmem [thread:$0]  %s135, 64, %s138, %s127
        $region20: #{tpu_custom_call.1} parent=15 // pred_fallthru
          _
        // Predicated region
        $region21: #{tpu_custom_call.1} parent=15 // pred_check
          %p141 = pneg %p72
        $region22: #{tpu_custom_call.1} parent=15 // pred_check_branch
          %143 = sbr.rel (%p141) target = $region24
        $region23: #{tpu_custom_call.1} parent=15 // pred_region
          %s144 = sand.u32 %s62, 1
          %s145 = scalar_lea.sflag [#allocation8], %s144
          %s146 = sand.u32 %s62, 1
          %s147 = smul.addr %s146, 4
          %s148 = scalar_lea.vmem [#allocation7], %s147
          %s150 = ssub.s32 64, 64
          %151 = vsyncadd %s145, %s150
          %s152 = smul.addr %s22, 64
          %s153 = scalar_lea.hbm %s1, %s152
          %s155 = sshll.u32 %s148, 4
          %s156 = int_to_ptr.vmem [resolvable:$true] %s155
          %158 = dma.hbm_to_vmem [thread:$0]  %s153, 64, %s156, %s145
        $region24: #{tpu_custom_call.1} parent=15 // pred_fallthru
          _
      $region16: #{tpu_custom_call.1} parent=5 // pred_fallthru
        _
      %p159 = scmp.le.s32.totalorder 1, %s14
      %p160 = scmp.lt.s32.totalorder %s14, 5
      %p161 = pnand %p159, %p160
      %p162 = pneg %p161
      // Predicated region
      $region25: #{tpu_custom_call.1} parent=5 // pred_check
        _
      $region26: #{tpu_custom_call.1} parent=5 // pred_check_branch
        %164 = sbr.rel (%p161) target = $region28
      $region27: #{tpu_custom_call.1} parent=5 // pred_region
        %s165 = ssub.s32 %s14, 1
        %s166 = sand.u32 %s39, 1
        %s167 = scalar_lea.sflag [#allocation6], %s166
        %s168 = sand.u32 %s39, 1
        %s169 = smul.addr %s168, 4
        %s170 = scalar_lea.vmem [#allocation5], %s169
        // Predicated region
        $region29: #{tpu_custom_call.1} parent=27 // pred_check
          %p171 = pneg %p52
        $region30: #{tpu_custom_call.1} parent=27 // pred_check_branch
          %173 = sbr.rel (%p171) target = $region32
        $region31: #{tpu_custom_call.1} parent=27 // pred_region
          %174 = dma.done %s167, 64
        $region32: #{tpu_custom_call.1} parent=27 // pred_fallthru
          _
        %s175 = sand.u32 %s65, 1
        %s176 = scalar_lea.sflag [#allocation8], %s175
        %s177 = sand.u32 %s65, 1
        %s178 = smul.addr %s177, 4
        %s179 = scalar_lea.vmem [#allocation7], %s178
        // Predicated region
        $region33: #{tpu_custom_call.1} parent=27 // pred_check
          %p180 = pneg %p78
        $region34: #{tpu_custom_call.1} parent=27 // pred_check_branch
          %182 = sbr.rel (%p180) target = $region36
        $region35: #{tpu_custom_call.1} parent=27 // pred_region
          %183 = dma.done %s176, 64
        $region36: #{tpu_custom_call.1} parent=27 // pred_fallthru
          _
        %s184 = sand.u32 %s39, 1
        %s185 = scalar_lea.sflag [#allocation6], %s184
        %s186 = sand.u32 %s39, 1
        %s187 = smul.addr %s186, 4
        %s188 = scalar_lea.vmem [#allocation5], %s187
        %p189 = pneg %p52
        %p190 = pneg %p49
        %s191 = sand.u32 %s65, 1
        %s192 = scalar_lea.sflag [#allocation8], %s191
        %s193 = sand.u32 %s65, 1
        %s194 = smul.addr %s193, 4
        %s195 = scalar_lea.vmem [#allocation7], %s194
        %p196 = pneg %p78
        %p197 = pneg %p75
        %p198 = pneg %p104
        %p199 = pneg %p101
        %p200 = scmp.lt.s32.totalorder %s23, 1
        %s201 = scalar_select %p200, %s23, 1
        %s202 = smul.addr %s201, 8
        %s203 = scalar_lea.vmem %s2, %s202
        %p204 = scmp.lt.s32.totalorder %s23, 1
        %s205 = scalar_select %p204, %s23, 1
        %s206 = smul.addr %s205, 8
        %s207 = scalar_lea.vmem %s2, %s206
        %p209 = scmp.eq.s32.totalorder %s24, 0
        // Predicated region
        $region37: #{tpu_custom_call.1} parent=27 // pred_check
          %p210 = pneg %p209
        $region38: #{tpu_custom_call.1} parent=27 // pred_check_branch
          %212 = sbr.rel (%p210) target = $region40
        $region39: #{tpu_custom_call.1} parent=27 // pred_region
          %vm213 = vcmask 7168
          %214 = vst.msk [vmem:[#allocation2] sm:$0xff] %vm213, -inf
          %215 = vst.msk [vmem:[#allocation3] sm:$0xff] %vm213, 0.0
          %216 = vst.msk [vmem:[#allocation4] sm:$0xff] %vm213, 0.0
        $region40: #{tpu_custom_call.1} parent=27 // pred_fallthru
          _
        %v217 = vld [vmem:[%s170] sm:$0xf]
        %v218 = vld [vmem:[%s179] sm:$0xf]
        %vm219 = vcmask 261120
        %v221 = vsel %vm219, %v217, 0
        %v224 = vsel %vm219, %v218, 0
        %226 = vmatprep.subr.bf16.mxu0 0
        %227 = vmatpush1.bf16.xpose.msra.mxu0 %v224
        %228 = vmatprep.subr.bf16.mxu0 0
        %229 = vmatpush1.bf16.xpose.msra.mxu0 0
        %230 = vmatprep.subr.bf16.mxu0 0
        %231 = vmatpush1.bf16.xpose.msra.mxu0 0
        %232 = vmatprep.subr.bf16.mxu0 0
        %233 = vmatpush1.bf16.xpose.msra.mxu0 0
        %234 = vmatprep.subr.bf16.mxu0 0
        %235 = vmatpush1.bf16.xpose.msra.mxu0 0
        %236 = vmatprep.subr.bf16.mxu0 0
        %237 = vmatpush1.bf16.xpose.msra.mxu0 0
        %238 = vmatprep.subr.bf16.mxu0 0
        %239 = vmatpush1.bf16.xpose.msra.mxu0 0
        %240 = vmatprep.subr.bf16.mxu0 0
        %241 = vmatpush1.bf16.xpose.msra.mxu0 0
        %242 = vmatprep.subr.bf16.mxu0 0
        %243 = vmatpush1.bf16.xpose.msra.mxu0 0
        %244 = vmatprep.subr.bf16.mxu0 0
        %245 = vmatpush1.bf16.xpose.msra.mxu0 0
        %246 = vmatprep.subr.bf16.mxu0 0
        %247 = vmatpush1.bf16.xpose.msra.mxu0 0
        %248 = vmatprep.subr.bf16.mxu0 0
        %249 = vmatpush1.bf16.xpose.msra.mxu0 0
        %250 = vmatprep.subr.bf16.mxu0 0
        %251 = vmatpush1.bf16.xpose.msra.mxu0 0
        %252 = vmatprep.subr.bf16.mxu0 0
        %253 = vmatpush1.bf16.xpose.msra.mxu0 0
        %254 = vmatprep.subr.bf16.mxu0 0
        %255 = vmatpush1.bf16.xpose.msra.mxu0 0
        %256 = vmatprep.subr.bf16.mxu0 0
        %257 = vmatpush1.bf16.xpose.msra.mxu0 0
        %258 = vmatprep.mubr.bf16.mxu0 0
        %259 = vmatmul.mubr.bf16.gmra.mrb[0].mxu0 %v221
        %v260 = vpop.f32.mrb[0].mxu0
        %v261 = vadd.f32 0.0, %v260
        %v262 = vpop.f32.mrb[0].mxu0
        %v263 = vpop.f32.mrb[0].mxu0
        %v264 = vpop.f32.mrb[0].mxu0
        %265 = vdwg.mxu0
        %v266 = vlaneseq
        %v267 = vshrl.u32 %v266, 7
        %v268 = vlaneseq
        %v269 = vand.u32 %v268, 127
        %vm270 = vcmp.eq.s32.totalorder %v267, %v269
        %p271 = scmp.lt.s32.totalorder %s23, 1
        %s272 = sadd.s32 %s23, 1
        %s273 = ssub.s32 %s23, 1
        %s274 = scalar_select %p271, %s272, %s273
        %p275 = scmp.eq.s32.totalorder %s24, %s274
        // Predicated region
        $region41: #{tpu_custom_call.1} parent=27 // pred_check
          %p276 = pneg %p275
        $region42: #{tpu_custom_call.1} parent=27 // pred_check_branch
          %278 = sbr.rel (%p276) target = $region44
        $region43: #{tpu_custom_call.1} parent=27 // pred_region
          %v279 = vsel %vm270, %v261, 0.0
          %vm280 = vcmask 64512
          %v281 = vsel %vm280, %v279, 0.0
          %282 = vadd.xlane.f32.xlu0 %v281
          %v283 = vpop.xlane.xlu0 %282
          %vm284 = vcmask 7168
          %285 = vst.msk [vmem:[#allocation4] sm:$0xff] %vm284, %v283
        $region44: #{tpu_custom_call.1} parent=27 // pred_fallthru
          _
        %p286 = scmp.eq.s32.totalorder %s23, %s24
        %s287 = scalar_select %p286, 1, 0
        %v288 = vstv %s287
        %vm289 = vcmp.eq.s32.totalorder %v288, 1
        %vm290 = vmand %vm289, %vm270
        %v291 = vsel %vm290, -inf, %v261
        %v292 = vld [vmem:[#allocation2] sm:$0xff]
        %vm293 = vcmask 64512
        %v294 = vsel %vm293, %v291, -inf
        %295 = vmax.xlane.f32.xlu0 %v294
        %v296 = vpop.xlane.xlu0 %295
        %v297 = vmax.f32 %v292, %v296
        %v298 = vsub.f32 %v292, %v297
        %v299 = vmul.f32 %v298, 1.442695
        %v300 = vpow.pop %v299
        %v301 = vld [vmem:[#allocation3] sm:$0xff]
        %v302 = vmul.f32 %v300, %v301
        %304 = vset.pattern.permute.xlu0 0
        %305 = vperm.xlu0 %304, %v297
        %v306 = vpop.permute.xlu0 %305
        %v308 = vsub.f32 %v291, %v306
        %v309 = vmul.f32 %v308, 1.442695
        %v310 = vpow.pop %v309
        %v311 = vsel %vm293, %v310, 0.0
        %312 = vadd.xlane.f32.xlu0 %v311
        %v313 = vpop.xlane.xlu0 %312
        %v314 = vadd.f32 %v302, %v313
        %vm315 = vcmask 7168
        %316 = vst.msk [vmem:[#allocation3] sm:$0xff] %vm315, %v314
        %317 = vst.msk [vmem:[#allocation2] sm:$0xff] %vm315, %v297
        %p318 = scmp.eq.s32.totalorder %s24, 1
        // Predicated region
        $region45: #{tpu_custom_call.1} parent=27 // pred_check
          %p319 = pneg %p318
        $region46: #{tpu_custom_call.1} parent=27 // pred_check_branch
          %321 = sbr.rel (%p319) target = $region48
        $region47: #{tpu_custom_call.1} parent=27 // pred_region
          %v322 = vld [vmem:[#allocation2] sm:$0xff]
          %v323 = vld [vmem:[#allocation3] sm:$0xff]
          %v324 = vlog2.pop %v323
          %v325 = vmul.f32 %v324, 0.6931472
          %v326 = vadd.f32 %v322, %v325
          %v327 = vld [vmem:[#allocation4] sm:$0xff]
          %v328 = vsub.f32 %v326, %v327
          %329 = vst.msk [vmem:[%s207] sm:$0xff] %vm315, %v328
        $region48: #{tpu_custom_call.1} parent=27 // pred_fallthru
          _
        %p330 = scmp.lt.s32.totalorder %s23, 1
        %s331 = scalar_select %p330, %s23, 1
        %s332 = smul.addr %s331, 8
        %s333 = scalar_lea.vmem %s2, %s332
        // Predicated region
        $region49: #{tpu_custom_call.1} parent=27 // pred_check
          %p334 = pneg %p101
        $region50: #{tpu_custom_call.1} parent=27 // pred_check_branch
          %336 = sbr.rel (%p334) target = $region52
        $region51: #{tpu_custom_call.1} parent=27 // pred_region
          _
        $region52: #{tpu_custom_call.1} parent=27 // pred_fallthru
          _
      $region28: #{tpu_custom_call.1} parent=5 // pred_fallthru
        _
      %p337 = scmp.le.s32.totalorder 2, %s14
      // Predicated region
      $region53: #{tpu_custom_call.1} parent=5 // pred_check
        %p338 = pneg %p337
      $region54: #{tpu_custom_call.1} parent=5 // pred_check_branch
        %340 = sbr.rel (%p338) target = $region56
      $region55: #{tpu_custom_call.1} parent=5 // pred_region
        %s341 = ssub.s32 %s14, 2
        // Predicated region
        $region57: #{tpu_custom_call.1} parent=55 // pred_check
          %p342 = pneg %p107
        $region58: #{tpu_custom_call.1} parent=55 // pred_check_branch
          %344 = sbr.rel (%p342) target = $region60
        $region59: #{tpu_custom_call.1} parent=55 // pred_region
          %p345 = scmp.lt.s32.totalorder %s25, 1
          %s346 = scalar_select %p345, %s25, 1
          %s347 = smul.addr %s346, 8
          %s348 = scalar_lea.vmem %s2, %s347
        $region60: #{tpu_custom_call.1} parent=55 // pred_fallthru
          _
      $region56: #{tpu_custom_call.1} parent=5 // pred_fallthru
        _
    $region6: #{tpu_custom_call.1} parent=1 // loop_footer
      %s18 = sadd.s32 1, %s14
    $region7: #{tpu_custom_call.1} parent=1 // loop_footer_branch
      %13 = sbr.rel target = $region3
    $region8: #{tpu_custom_call.1} parent=1 // loop_exit
      _
    %349 = vsyncpa [#allocation6], 1
    %s350 = scalar_lea.sflag [#allocation6], 1
    %351 = vsyncpa %s350, 1
    %352 = vsyncpa [#allocation8], 1
    %s353 = scalar_lea.sflag [#allocation8], 1
    %354 = vsyncpa %s353, 1

</llo_original>
